<compile_context>
chip_gen: v6e
topology: v6e:2x2x1
jax: 0.10.0
libtpu: 0.0.40
codegen_flags: <defaults>
</compile_context>

<pallas_src>
import jax
import jax.numpy as jnp
from jax import lax
from jax.experimental import pallas as pl
from jax.experimental.pallas import tpu as pltpu

_LANE = 128
_SUBLANE = 8


def _round_up(n, m):
    return (n + m - 1) // m * m


def _gelu_exact_f32(x):
    # PyTorch F.gelu default ("none"): 0.5 * x * (1 + erf(x / sqrt(2))), in f32.
    return 0.5 * x * (1.0 + lax.erf(x * 0.7071067811865476))


def mlp_kernel(x_ref, w1_ref, b1_ref, w2_ref, b2_ref, w3_ref, b3_ref, o_ref):
    # bf16 operands -> MXU, f32 accumulate, f32 element-wise GELU.
    x = x_ref[...]                                                   # (TB, K1) bf16
    h1 = jnp.dot(x, w1_ref[...], preferred_element_type=jnp.float32) + b1_ref[...]
    h1 = _gelu_exact_f32(h1).astype(w2_ref.dtype)                    # back to bf16 for MXU
    h2 = jnp.dot(h1, w2_ref[...], preferred_element_type=jnp.float32) + b2_ref[...]
    h2 = _gelu_exact_f32(h2).astype(w3_ref.dtype)
    h3 = jnp.dot(h2, w3_ref[...], preferred_element_type=jnp.float32) + b3_ref[...]
    o_ref[...] = h3.astype(o_ref.dtype)


def net_forward(x, params, *, block_batch=256, compute_dtype=jnp.bfloat16):
    """Forward pass of Net. x: (batch, input_dim) f32. Returns (batch, output_dim) f32."""
    w1, b1, w2, b2, w3, b3 = params
    batch, input_dim = x.shape
    width = w1.shape[1]
    out_dim = w3.shape[1]

    # Lane-pad feature dims to multiples of 128; sublane-pad/tile the batch.
    k1p = _round_up(input_dim, _LANE)
    wp = _round_up(width, _LANE)
    outp = _round_up(out_dim, _LANE)
    tb = min(block_batch, _round_up(batch, _SUBLANE))   # batch tile (multiple of 8)
    pb = _round_up(batch, tb)                           # padded batch

    def pad2(a, rows, cols):
        return jnp.pad(a, ((0, rows - a.shape[0]), (0, cols - a.shape[1])))

    xp = pad2(x, pb, k1p).astype(compute_dtype)
    w1p = pad2(w1, k1p, wp).astype(compute_dtype)
    w2p = pad2(w2, wp, wp).astype(compute_dtype)
    w3p = pad2(w3, wp, outp).astype(compute_dtype)
    b1p = pad2(b1.reshape(1, -1), 1, wp).astype(jnp.float32)
    b2p = pad2(b2.reshape(1, -1), 1, wp).astype(jnp.float32)
    b3p = pad2(b3.reshape(1, -1), 1, outp).astype(jnp.float32)

    grid = (pb // tb,)

    def resident(shape):  # weights/biases: same block every grid step -> stay in VMEM
        return pl.BlockSpec(shape, lambda i: (0, 0))

    flops = 2 * pb * (k1p * wp + wp * wp + wp * outp)
    bytes_accessed = (
        xp.size * xp.dtype.itemsize
        + sum(a.size * a.dtype.itemsize for a in (w1p, b1p, w2p, b2p, w3p, b3p))
        + pb * outp * 4
    )
    cost = pl.CostEstimate(
        flops=flops, transcendentals=2 * pb * wp, bytes_accessed=bytes_accessed
    )

    out_padded = pl.pallas_call(
        mlp_kernel,
        out_shape=jax.ShapeDtypeStruct((pb, outp), jnp.float32),
        grid_spec=pltpu.PrefetchScalarGridSpec(
            num_scalar_prefetch=0,
            grid=grid,
            in_specs=[
                pl.BlockSpec((tb, k1p), lambda i: (i, 0)),   # x: tiled over batch
                resident((k1p, wp)),                         # w1
                resident((1, wp)),                           # b1
                resident((wp, wp)),                          # w2
                resident((1, wp)),                           # b2
                resident((wp, outp)),                        # w3
                resident((1, outp)),                         # b3
            ],
            out_specs=pl.BlockSpec((tb, outp), lambda i: (i, 0)),
        ),
        compiler_params=pltpu.CompilerParams(
            dimension_semantics=("parallel",),               # megacore batch split on v7x
        ),
        cost_estimate=cost,
    )(xp, w1p, b1p, w2p, b2p, w3p, b3p)

    return out_padded[:batch, :out_dim]


def init_params(key, input_dim, width, output_dim):
    # TODO(synk): module's utils.initializer is not available; use deterministic
    # small-normal weights and zero biases instead. Weights stored as (in, out).
    k1, k2, k3 = jax.random.split(key, 3)
    w1 = jax.random.normal(k1, (input_dim, width), jnp.float32) * 0.05
    b1 = jnp.zeros((width,), jnp.float32)
    w2 = jax.random.normal(k2, (width, width), jnp.float32) * 0.05
    b2 = jnp.zeros((width,), jnp.float32)
    w3 = jax.random.normal(k3, (width, output_dim), jnp.float32) * 0.05
    b3 = jnp.zeros((output_dim,), jnp.float32)
    return (w1, b1, w2, b2, w3, b3)


def reference_forward(x, params, compute_dtype=jnp.float32):
    """Pure-JAX reference; compute_dtype mimics the kernel's MXU operand dtype."""
    w1, b1, w2, b2, w3, b3 = params
    c = lambda a: a.astype(compute_dtype)
    h = jnp.dot(c(x), c(w1), preferred_element_type=jnp.float32) + b1
    h = jax.nn.gelu(h, approximate=False)
    h = jnp.dot(c(h), c(w2), preferred_element_type=jnp.float32) + b2
    h = jax.nn.gelu(h, approximate=False)
    return jnp.dot(c(h), c(w3), preferred_element_type=jnp.float32) + b3


if __name__ == "__main__":
    batch, input_dim, width, output_dim = 8, 32, 64, 16

    key = jax.random.PRNGKey(0)
    kx, kp = jax.random.split(key)
    x = jax.random.normal(kx, (batch, input_dim), jnp.float32)
    params = init_params(kp, input_dim, width, output_dim)

    out = net_forward(x, params)
    out = jax.block_until_ready(out)
    assert out.shape == (batch, output_dim)

    # Tight check vs. a reference using the same bf16 MXU operands.
    ref_bf16 = reference_forward(x, params, compute_dtype=jnp.bfloat16)
    assert jnp.allclose(out, ref_bf16, atol=2e-3, rtol=2e-3)

    # Loose check vs. the full-f32 reference (bf16 operand rounding only).
    ref_f32 = reference_forward(x, params, compute_dtype=jnp.float32)
    assert jnp.allclose(out, ref_f32, atol=3e-2, rtol=3e-2)

    print("KERNEL_OK")
</pallas_src>

<mosaic_0001>
module attributes {stable_mosaic.version = 11 : i64} {
  func.func @mlp_kernel(%arg0: i32, %arg1: memref<8x128xbf16, #tpu.memory_space<vmem>>, %arg2: memref<128x128xbf16, #tpu.memory_space<vmem>>, %arg3: memref<1x128xf32, #tpu.memory_space<vmem>>, %arg4: memref<128x128xbf16, #tpu.memory_space<vmem>>, %arg5: memref<1x128xf32, #tpu.memory_space<vmem>>, %arg6: memref<128x128xbf16, #tpu.memory_space<vmem>>, %arg7: memref<1x128xf32, #tpu.memory_space<vmem>>, %arg8: memref<8x128xf32, #tpu.memory_space<vmem>>) attributes {dimension_semantics = [#tpu.dimension_semantics<parallel>], iteration_bounds = array<i64: 1>, scalar_prefetch = 0 : i64, scratch_operands = 0 : i64, tpu.core_type = #tpu.core_type<tc>, window_params = [{transform_indices = @transform_0, window_bounds = array<i64: 8, 128>}, {pipeline_mode = #tpu.pipeline_mode<synchronous>, transform_indices = @transform_1, window_bounds = array<i64: 128, 128>}, {pipeline_mode = #tpu.pipeline_mode<synchronous>, transform_indices = @transform_2, window_bounds = array<i64: 1, 128>}, {pipeline_mode = #tpu.pipeline_mode<synchronous>, transform_indices = @transform_3, window_bounds = array<i64: 128, 128>}, {pipeline_mode = #tpu.pipeline_mode<synchronous>, transform_indices = @transform_4, window_bounds = array<i64: 1, 128>}, {pipeline_mode = #tpu.pipeline_mode<synchronous>, transform_indices = @transform_5, window_bounds = array<i64: 128, 128>}, {pipeline_mode = #tpu.pipeline_mode<synchronous>, transform_indices = @transform_6, window_bounds = array<i64: 1, 128>}, {transform_indices = @transform_7, window_bounds = array<i64: 8, 128>}]} {
    %c0 = arith.constant 0 : index
    %c0_0 = arith.constant 0 : index
    %0 = vector.load %arg1[%c0, %c0_0] : memref<8x128xbf16, #tpu.memory_space<vmem>>, vector<8x128xbf16>
    %c0_1 = arith.constant 0 : index
    %c0_2 = arith.constant 0 : index
    %1 = vector.load %arg2[%c0_1, %c0_2] : memref<128x128xbf16, #tpu.memory_space<vmem>>, vector<128x128xbf16>
    %cst = arith.constant dense<0.000000e+00> : vector<8x128xf32>
    %2 = tpu.matmul %0, %1, %cst {dimension_numbers = #tpu.dot_dimension_numbers<[1], [0], [0], [1], [0, 0, 1, 1], [], []>} : vector<8x128xbf16>, vector<128x128xbf16>, vector<8x128xf32> -> vector<8x128xf32>
    %c0_3 = arith.constant 0 : index
    %c0_4 = arith.constant 0 : index
    %3 = vector.load %arg3[%c0_3, %c0_4] : memref<1x128xf32, #tpu.memory_space<vmem>>, vector<1x128xf32>
    %4 = vector.broadcast %3 : vector<1x128xf32> to vector<8x128xf32>
    %5 = arith.addf %2, %4 : vector<8x128xf32>
    %cst_5 = arith.constant 5.000000e-01 : f32
    %6 = vector.broadcast %cst_5 : f32 to vector<8x128xf32>
    %7 = arith.mulf %6, %5 : vector<8x128xf32>
    %cst_6 = arith.constant 0.707106769 : f32
    %8 = vector.broadcast %cst_6 : f32 to vector<8x128xf32>
    %9 = arith.mulf %5, %8 : vector<8x128xf32>
    %10 = math.erf %9 : vector<8x128xf32>
    %cst_7 = arith.constant 1.000000e+00 : f32
    %11 = vector.broadcast %cst_7 : f32 to vector<8x128xf32>
    %12 = arith.addf %11, %10 : vector<8x128xf32>
    %13 = arith.mulf %7, %12 : vector<8x128xf32>
    %14 = arith.truncf %13 : vector<8x128xf32> to vector<8x128xbf16>
    %c0_8 = arith.constant 0 : index
    %c0_9 = arith.constant 0 : index
    %15 = vector.load %arg4[%c0_8, %c0_9] : memref<128x128xbf16, #tpu.memory_space<vmem>>, vector<128x128xbf16>
    %cst_10 = arith.constant dense<0.000000e+00> : vector<8x128xf32>
    %16 = tpu.matmul %14, %15, %cst_10 {dimension_numbers = #tpu.dot_dimension_numbers<[1], [0], [0], [1], [0, 0, 1, 1], [], []>} : vector<8x128xbf16>, vector<128x128xbf16>, vector<8x128xf32> -> vector<8x128xf32>
    %c0_11 = arith.constant 0 : index
    %c0_12 = arith.constant 0 : index
    %17 = vector.load %arg5[%c0_11, %c0_12] : memref<1x128xf32, #tpu.memory_space<vmem>>, vector<1x128xf32>
    %18 = vector.broadcast %17 : vector<1x128xf32> to vector<8x128xf32>
    %19 = arith.addf %16, %18 : vector<8x128xf32>
    %cst_13 = arith.constant 5.000000e-01 : f32
    %20 = vector.broadcast %cst_13 : f32 to vector<8x128xf32>
    %21 = arith.mulf %20, %19 : vector<8x128xf32>
    %cst_14 = arith.constant 0.707106769 : f32
    %22 = vector.broadcast %cst_14 : f32 to vector<8x128xf32>
    %23 = arith.mulf %19, %22 : vector<8x128xf32>
    %24 = math.erf %23 : vector<8x128xf32>
    %cst_15 = arith.constant 1.000000e+00 : f32
    %25 = vector.broadcast %cst_15 : f32 to vector<8x128xf32>
    %26 = arith.addf %25, %24 : vector<8x128xf32>
    %27 = arith.mulf %21, %26 : vector<8x128xf32>
    %28 = arith.truncf %27 : vector<8x128xf32> to vector<8x128xbf16>
    %c0_16 = arith.constant 0 : index
    %c0_17 = arith.constant 0 : index
    %29 = vector.load %arg6[%c0_16, %c0_17] : memref<128x128xbf16, #tpu.memory_space<vmem>>, vector<128x128xbf16>
    %cst_18 = arith.constant dense<0.000000e+00> : vector<8x128xf32>
    %30 = tpu.matmul %28, %29, %cst_18 {dimension_numbers = #tpu.dot_dimension_numbers<[1], [0], [0], [1], [0, 0, 1, 1], [], []>} : vector<8x128xbf16>, vector<128x128xbf16>, vector<8x128xf32> -> vector<8x128xf32>
    %c0_19 = arith.constant 0 : index
    %c0_20 = arith.constant 0 : index
    %31 = vector.load %arg7[%c0_19, %c0_20] : memref<1x128xf32, #tpu.memory_space<vmem>>, vector<1x128xf32>
    %32 = vector.broadcast %31 : vector<1x128xf32> to vector<8x128xf32>
    %33 = arith.addf %30, %32 : vector<8x128xf32>
    %c0_21 = arith.constant 0 : index
    %c0_22 = arith.constant 0 : index
    %34 = vector.load %arg8[%c0_21, %c0_22] : memref<8x128xf32, #tpu.memory_space<vmem>>, vector<8x128xf32>
    tpu.vector_store %arg8[%c0_21, %c0_22], %33 {strides = array<i32>} : memref<8x128xf32, #tpu.memory_space<vmem>>, vector<8x128xf32>,
    return
  }
  func.func @transform_0(%arg0: i32) -> (i32, i32) {
    %c0_i32 = arith.constant 0 : i32
    %c0_i32_0 = arith.constant 0 : i32
    return %arg0, %c0_i32 : i32, i32
  }
  func.func @transform_1(%arg0: i32) -> (i32, i32) {
    %c0_i32 = arith.constant 0 : i32
    %c0_i32_0 = arith.constant 0 : i32
    %c0_i32_1 = arith.constant 0 : i32
    return %c0_i32, %c0_i32_0 : i32, i32
  }
  func.func @transform_2(%arg0: i32) -> (i32, i32) {
    %c0_i32 = arith.constant 0 : i32
    %c0_i32_0 = arith.constant 0 : i32
    %c0_i32_1 = arith.constant 0 : i32
    return %c0_i32, %c0_i32_0 : i32, i32
  }
  func.func @transform_3(%arg0: i32) -> (i32, i32) {
    %c0_i32 = arith.constant 0 : i32
    %c0_i32_0 = arith.constant 0 : i32
    %c0_i32_1 = arith.constant 0 : i32
    return %c0_i32, %c0_i32_0 : i32, i32
  }
  func.func @transform_4(%arg0: i32) -> (i32, i32) {
    %c0_i32 = arith.constant 0 : i32
    %c0_i32_0 = arith.constant 0 : i32
    %c0_i32_1 = arith.constant 0 : i32
    return %c0_i32, %c0_i32_0 : i32, i32
  }
  func.func @transform_5(%arg0: i32) -> (i32, i32) {
    %c0_i32 = arith.constant 0 : i32
    %c0_i32_0 = arith.constant 0 : i32
    %c0_i32_1 = arith.constant 0 : i32
    return %c0_i32, %c0_i32_0 : i32, i32
  }
  func.func @transform_6(%arg0: i32) -> (i32, i32) {
    %c0_i32 = arith.constant 0 : i32
    %c0_i32_0 = arith.constant 0 : i32
    %c0_i32_1 = arith.constant 0 : i32
    return %c0_i32, %c0_i32_0 : i32, i32
  }
  func.func @transform_7(%arg0: i32) -> (i32, i32) {
    %c0_i32 = arith.constant 0 : i32
    %c0_i32_0 = arith.constant 0 : i32
    return %arg0, %c0_i32 : i32, i32
  }
}

</mosaic_0001>

<llo_original>
// kernel: tpu_custom_call.1
$region0: #{tpu_custom_call.1}
  #allocation0 [shape = 'u32[]', space=smem, size = 0x4, offset = 0x4, fixed_abs, tag = 'smem constant byte address 0x4 - core index']
  #allocation1 [shape = 'u32[144,128]{1,0:T(1,128)}', space=vmem, size = 0x12000, scoped, tag = 'internal scratch']
  %s0 = inlined_call_operand.hbm [shape: bf16[8,128], index: 0, kind: input, shape index: {}]
  %s1 = inlined_call_operand.hbm [shape: bf16[128,128], index: 1, kind: input, shape index: {}]
  %s2 = inlined_call_operand.vmem [shape: f32[1,128], index: 2, kind: input, shape index: {}]
  %s3 = inlined_call_operand.hbm [shape: bf16[128,128], index: 3, kind: input, shape index: {}]
  %s4 = inlined_call_operand.vmem [shape: f32[1,128], index: 4, kind: input, shape index: {}]
  %s5 = inlined_call_operand.hbm [shape: bf16[128,128], index: 5, kind: input, shape index: {}]
  %s6 = inlined_call_operand.vmem [shape: f32[1,128], index: 6, kind: input, shape index: {}]
  %s7 = inlined_call_operand.hbm [shape: f32[8,128], index: 7, kind: output, shape index: {}]
  %s8 = sld [smem:[#allocation0]]
  $region54: #{tpu_custom_call.1} parent=0
    _
  %s10 = ssub.s32 1, %s8
  %s11 = scalar_select 0, %s10, %s8
  $region1: #{tpu_custom_call.1} parent=0
    #allocation2 [shape = 'u8[2048]{0}', space=vmem, size = 0x800, scoped, tag = 'input window, operand 0, single buffered']
    #allocation3 [shape = 's32[1]{0}', space=sflag, size = 0x4, scoped, tag = 'scoped memory for tpu_custom_call.1']
    #allocation4 [shape = 's32[1]{0}', space=sflag, size = 0x4, scoped, tag = 'scoped memory for tpu_custom_call.1']
    #allocation5 [shape = 'u8[32768]{0}', space=vmem, size = 0x8000, scoped, tag = 'input window, operand 1, single buffered']
    #allocation6 [shape = 's32[1]{0}', space=sflag, size = 0x4, scoped, tag = 'scoped memory for tpu_custom_call.1']
    #allocation7 [shape = 'u8[32768]{0}', space=vmem, size = 0x8000, scoped, tag = 'input window, operand 3, single buffered']
    #allocation8 [shape = 'u8[32768]{0}', space=vmem, size = 0x8000, scoped, tag = 'input window, operand 5, single buffered']
    #allocation9 [shape = 's32[1]{0}', space=sflag, size = 0x4, scoped, tag = 'scoped memory for tpu_custom_call.1']
    #allocation10 [shape = 'u8[4096]{0}', space=vmem, size = 0x1000, scoped, tag = 'output window, operand 0, single buffered']
    %12 = vsyncpa [#allocation3], 0
    %13 = vsyncpa [#allocation6], 0
    %14 = vsyncpa [#allocation9], 0
    %15 = vsyncpa [#allocation4], 0
    // Predicated region
    $region2: #{tpu_custom_call.1} parent=1 // pred_check
      _
    $region3: #{tpu_custom_call.1} parent=1 // pred_check_branch
      %17 = sbr.rel (0) target = $region5
    $region4: #{tpu_custom_call.1} parent=1 // pred_region
      %s19 = ssub.s32 64, 64
      %20 = vsyncadd [#allocation3], %s19
      %s22 = sshll.u32 [#allocation2], 4
      %s23 = int_to_ptr.vmem [resolvable:$true] %s22
      %25 = dma.hbm_to_vmem [thread:$0]  %s0, 64, %s23, [#allocation3]
    $region5: #{tpu_custom_call.1} parent=1 // pred_fallthru
      _
    // Predicated region
    $region6: #{tpu_custom_call.1} parent=1 // pred_check
      _
    $region7: #{tpu_custom_call.1} parent=1 // pred_check_branch
      %27 = sbr.rel (0) target = $region9
    $region8: #{tpu_custom_call.1} parent=1 // pred_region
      %s29 = ssub.s32 1024, 1024
      %30 = vsyncadd [#allocation6], %s29
      %s31 = sshll.u32 [#allocation5], 4
      %s32 = int_to_ptr.vmem [resolvable:$true] %s31
      %37 = dma.hbm_to_vmem [thread:$0]  %s1, 1024, %s32, [#allocation6], 64, 64, 4
    $region9: #{tpu_custom_call.1} parent=1 // pred_fallthru
      _
    // Predicated region
    $region10: #{tpu_custom_call.1} parent=1 // pred_check
      _
    $region11: #{tpu_custom_call.1} parent=1 // pred_check_branch
      %39 = sbr.rel (0) target = $region13
    $region12: #{tpu_custom_call.1} parent=1 // pred_region
      _
    $region13: #{tpu_custom_call.1} parent=1 // pred_fallthru
      _
    // Predicated region
    $region14: #{tpu_custom_call.1} parent=1 // pred_check
      _
    $region15: #{tpu_custom_call.1} parent=1 // pred_check_branch
      %41 = sbr.rel (0) target = $region17
    $region16: #{tpu_custom_call.1} parent=1 // pred_region
      %s43 = ssub.s32 1024, 1024
      %44 = vsyncadd [#allocation6], %s43
      %s45 = sshll.u32 [#allocation7], 4
      %s46 = int_to_ptr.vmem [resolvable:$true] %s45
      %51 = dma.hbm_to_vmem [thread:$0]  %s3, 1024, %s46, [#allocation6], 64, 64, 4
    $region17: #{tpu_custom_call.1} parent=1 // pred_fallthru
      _
    // Predicated region
    $region18: #{tpu_custom_call.1} parent=1 // pred_check
      _
    $region19: #{tpu_custom_call.1} parent=1 // pred_check_branch
      %53 = sbr.rel (0) target = $region21
    $region20: #{tpu_custom_call.1} parent=1 // pred_region
      _
    $region21: #{tpu_custom_call.1} parent=1 // pred_fallthru
      _
    // Predicated region
    $region22: #{tpu_custom_call.1} parent=1 // pred_check
      _
    $region23: #{tpu_custom_call.1} parent=1 // pred_check_branch
      %55 = sbr.rel (0) target = $region25
    $region24: #{tpu_custom_call.1} parent=1 // pred_region
      %s57 = ssub.s32 1024, 1024
      %58 = vsyncadd [#allocation9], %s57
      %s59 = sshll.u32 [#allocation8], 4
      %s60 = int_to_ptr.vmem [resolvable:$true] %s59
      %65 = dma.hbm_to_vmem [thread:$0]  %s5, 1024, %s60, [#allocation9], 64, 64, 4
    $region25: #{tpu_custom_call.1} parent=1 // pred_fallthru
      _
    // Predicated region
    $region26: #{tpu_custom_call.1} parent=1 // pred_check
      _
    $region27: #{tpu_custom_call.1} parent=1 // pred_check_branch
      %67 = sbr.rel (0) target = $region29
    $region28: #{tpu_custom_call.1} parent=1 // pred_region
      _
    $region29: #{tpu_custom_call.1} parent=1 // pred_fallthru
      _
    // Predicated region
    $region30: #{tpu_custom_call.1} parent=1 // pred_check
      _
    $region31: #{tpu_custom_call.1} parent=1 // pred_check_branch
      %69 = sbr.rel (0) target = $region33
    $region32: #{tpu_custom_call.1} parent=1 // pred_region
      %70 = dma.done [#allocation3], 64
    $region33: #{tpu_custom_call.1} parent=1 // pred_fallthru
      _
    // Predicated region
    $region34: #{tpu_custom_call.1} parent=1 // pred_check
      _
    $region35: #{tpu_custom_call.1} parent=1 // pred_check_branch
      %72 = sbr.rel (0) target = $region37
    $region36: #{tpu_custom_call.1} parent=1 // pred_region
      %73 = dma.done [#allocation6], 1024
    $region37: #{tpu_custom_call.1} parent=1 // pred_fallthru
      _
    // Predicated region
    $region38: #{tpu_custom_call.1} parent=1 // pred_check
      _
    $region39: #{tpu_custom_call.1} parent=1 // pred_check_branch
      %75 = sbr.rel (0) target = $region41
    $region40: #{tpu_custom_call.1} parent=1 // pred_region
      %76 = dma.done [#allocation6], 1024
    $region41: #{tpu_custom_call.1} parent=1 // pred_fallthru
      _
    // Predicated region
    $region42: #{tpu_custom_call.1} parent=1 // pred_check
      _
    $region43: #{tpu_custom_call.1} parent=1 // pred_check_branch
      %78 = sbr.rel (0) target = $region45
    $region44: #{tpu_custom_call.1} parent=1 // pred_region
      %79 = dma.done [#allocation9], 1024
    $region45: #{tpu_custom_call.1} parent=1 // pred_fallthru
      _
    %v81 = vld [vmem:[#allocation2] sm:$0xf]
    %v82 = vld [vmem:[#allocation5] sm:$0xf]
    %v83 = vld [vmem:[#allocation5 + $0x4] sm:$0xf]
    %v84 = vld [vmem:[#allocation5 + $0x8] sm:$0xf]
    %v85 = vld [vmem:[#allocation5 + $0xc] sm:$0xf]
    %v86 = vld [vmem:[#allocation5 + $0x10] sm:$0xf]
    %v87 = vld [vmem:[#allocation5 + $0x14] sm:$0xf]
    %v88 = vld [vmem:[#allocation5 + $0x18] sm:$0xf]
    %v89 = vld [vmem:[#allocation5 + $0x1c] sm:$0xf]
    %v90 = vld [vmem:[#allocation5 + $0x20] sm:$0xf]
    %v91 = vld [vmem:[#allocation5 + $0x24] sm:$0xf]
    %v92 = vld [vmem:[#allocation5 + $0x28] sm:$0xf]
    %v93 = vld [vmem:[#allocation5 + $0x2c] sm:$0xf]
    %v94 = vld [vmem:[#allocation5 + $0x30] sm:$0xf]
    %v95 = vld [vmem:[#allocation5 + $0x34] sm:$0xf]
    %v96 = vld [vmem:[#allocation5 + $0x38] sm:$0xf]
    %v97 = vld [vmem:[#allocation5 + $0x3c] sm:$0xf]
    %v98 = vld [vmem:[%s2] sm:$0x1]
    %v100 = vlaneseq
    %v101 = vshrl.u32 %v100, 7
    %v102 = vsub.s32 0, %v101
    %v103 = vrot.slane %v98, %v102
    %v121 = vunpack.c.l.b16 %v82
    %v122 = vunpack.c.l.b16 %v83
    %v123 = vunpack.c.l.b16 %v84
    %v124 = vunpack.c.l.b16 %v85
    %v125 = vunpack.c.l.b16 %v86
    %v126 = vunpack.c.l.b16 %v87
    %v127 = vunpack.c.l.b16 %v88
    %v128 = vunpack.c.l.b16 %v89
    %v129 = vunpack.c.l.b16 %v90
    %v130 = vunpack.c.l.b16 %v91
    %v131 = vunpack.c.l.b16 %v92
    %v132 = vunpack.c.l.b16 %v93
    %v133 = vunpack.c.l.b16 %v94
    %v134 = vunpack.c.l.b16 %v95
    %v135 = vunpack.c.l.b16 %v96
    %v136 = vunpack.c.l.b16 %v97
    %v137 = vpack.c.b16 %v122, %v121
    %v138 = vpack.c.b16 %v124, %v123
    %v139 = vpack.c.b16 %v126, %v125
    %v140 = vpack.c.b16 %v128, %v127
    %v141 = vpack.c.b16 %v130, %v129
    %v142 = vpack.c.b16 %v132, %v131
    %v143 = vpack.c.b16 %v134, %v133
    %v144 = vpack.c.b16 %v136, %v135
    %153 = vmatprep.subr.bf16.mxu0 0
    %154 = vmatpush1.bf16.msra.mxu0 %v144
    %155 = vmatprep.subr.bf16.mxu0 0
    %156 = vmatpush1.bf16.msra.mxu0 %v143
    %157 = vmatprep.subr.bf16.mxu0 0
    %158 = vmatpush1.bf16.msra.mxu0 %v142
    %159 = vmatprep.subr.bf16.mxu0 0
    %160 = vmatpush1.bf16.msra.mxu0 %v141
    %161 = vmatprep.subr.bf16.mxu0 0
    %162 = vmatpush1.bf16.msra.mxu0 %v140
    %163 = vmatprep.subr.bf16.mxu0 0
    %164 = vmatpush1.bf16.msra.mxu0 %v139
    %165 = vmatprep.subr.bf16.mxu0 0
    %166 = vmatpush1.bf16.msra.mxu0 %v138
    %167 = vmatprep.subr.bf16.mxu0 0
    %168 = vmatpush1.bf16.msra.mxu0 %v137
    %169 = vmatprep.subr.bf16.mxu0 0
    %170 = vmatpush2.bf16.msra.mxu0 0
    %171 = vmatprep.subr.bf16.mxu0 0
    %172 = vmatpush2.bf16.msra.mxu0 0
    %173 = vmatprep.subr.bf16.mxu0 0
    %174 = vmatpush2.bf16.msra.mxu0 0
    %175 = vmatprep.subr.bf16.mxu0 0
    %176 = vmatpush2.bf16.msra.mxu0 0
    %177 = vmatprep.subr.bf16.mxu0 0
    %178 = vmatpush2.bf16.msra.mxu0 0
    %179 = vmatprep.subr.bf16.mxu0 0
    %180 = vmatpush2.bf16.msra.mxu0 0
    %181 = vmatprep.subr.bf16.mxu0 0
    %182 = vmatpush2.bf16.msra.mxu0 0
    %183 = vmatprep.subr.bf16.mxu0 0
    %184 = vmatpush2.bf16.msra.mxu0 0
    %185 = vmatprep.mubr.bf16.mxu0 0
    %186 = vmatmul.mubr.bf16.gmra.mxu0 %v81
    %v187 = vpop.f32.mrf.mxu0
    %v188 = vadd.f32 %v103, %v187
    %v189 = vpop.f32.mrf.mxu0
    %v190 = vpop.f32.mrf.mxu0
    %v191 = vpop.f32.mrf.mxu0
    %192 = vdwg.mxu0
    %v193 = vmul.f32 %v188, 0.5
    %v194 = vmul.f32 %v188, 0.70710677
    %v195 = verf.f32.pop %v194
    %v196 = vadd.f32 %v195, 1.0
    %v197 = vmul.f32 %v193, %v196
    %v198 = vpack.c.bf16 %v197, %v197
    %v199 = vld [vmem:[#allocation7] sm:$0xf]
    %v200 = vld [vmem:[#allocation7 + $0x4] sm:$0xf]
    %v201 = vld [vmem:[#allocation7 + $0x8] sm:$0xf]
    %v202 = vld [vmem:[#allocation7 + $0xc] sm:$0xf]
    %v203 = vld [vmem:[#allocation7 + $0x10] sm:$0xf]
    %v204 = vld [vmem:[#allocation7 + $0x14] sm:$0xf]
    %v205 = vld [vmem:[#allocation7 + $0x18] sm:$0xf]
    %v206 = vld [vmem:[#allocation7 + $0x1c] sm:$0xf]
    %v207 = vld [vmem:[#allocation7 + $0x20] sm:$0xf]
    %v208 = vld [vmem:[#allocation7 + $0x24] sm:$0xf]
    %v209 = vld [vmem:[#allocation7 + $0x28] sm:$0xf]
    %v210 = vld [vmem:[#allocation7 + $0x2c] sm:$0xf]
    %v211 = vld [vmem:[#allocation7 + $0x30] sm:$0xf]
    %v212 = vld [vmem:[#allocation7 + $0x34] sm:$0xf]
    %v213 = vld [vmem:[#allocation7 + $0x38] sm:$0xf]
    %v214 = vld [vmem:[#allocation7 + $0x3c] sm:$0xf]
    %v215 = vld [vmem:[%s4] sm:$0x1]
    %v217 = vlaneseq
    %v218 = vshrl.u32 %v217, 7
    %v219 = vsub.s32 0, %v218
    %v220 = vrot.slane %v215, %v219
    %v238 = vunpack.c.l.b16 %v199
    %v239 = vunpack.c.l.b16 %v200
    %v240 = vunpack.c.l.b16 %v201
    %v241 = vunpack.c.l.b16 %v202
    %v242 = vunpack.c.l.b16 %v203
    %v243 = vunpack.c.l.b16 %v204
    %v244 = vunpack.c.l.b16 %v205
    %v245 = vunpack.c.l.b16 %v206
    %v246 = vunpack.c.l.b16 %v207
    %v247 = vunpack.c.l.b16 %v208
    %v248 = vunpack.c.l.b16 %v209
    %v249 = vunpack.c.l.b16 %v210
    %v250 = vunpack.c.l.b16 %v211
    %v251 = vunpack.c.l.b16 %v212
    %v252 = vunpack.c.l.b16 %v213
    %v253 = vunpack.c.l.b16 %v214
    %v254 = vpack.c.b16 %v239, %v238
    %v255 = vpack.c.b16 %v241, %v240
    %v256 = vpack.c.b16 %v243, %v242
    %v257 = vpack.c.b16 %v245, %v244
    %v258 = vpack.c.b16 %v247, %v246
    %v259 = vpack.c.b16 %v249, %v248
    %v260 = vpack.c.b16 %v251, %v250
    %v261 = vpack.c.b16 %v253, %v252
    %270 = vmatprep.subr.bf16.mxu0 0
    %271 = vmatpush1.bf16.msra.mxu0 %v261
    %272 = vmatprep.subr.bf16.mxu0 0
    %273 = vmatpush1.bf16.msra.mxu0 %v260
    %274 = vmatprep.subr.bf16.mxu0 0
    %275 = vmatpush1.bf16.msra.mxu0 %v259
    %276 = vmatprep.subr.bf16.mxu0 0
    %277 = vmatpush1.bf16.msra.mxu0 %v258
    %278 = vmatprep.subr.bf16.mxu0 0
    %279 = vmatpush1.bf16.msra.mxu0 %v257
    %280 = vmatprep.subr.bf16.mxu0 0
    %281 = vmatpush1.bf16.msra.mxu0 %v256
    %282 = vmatprep.subr.bf16.mxu0 0
    %283 = vmatpush1.bf16.msra.mxu0 %v255
    %284 = vmatprep.subr.bf16.mxu0 0
    %285 = vmatpush1.bf16.msra.mxu0 %v254
    %286 = vmatprep.subr.bf16.mxu0 0
    %287 = vmatpush2.bf16.msra.mxu0 0
    %288 = vmatprep.subr.bf16.mxu0 0
    %289 = vmatpush2.bf16.msra.mxu0 0
    %290 = vmatprep.subr.bf16.mxu0 0
    %291 = vmatpush2.bf16.msra.mxu0 0
    %292 = vmatprep.subr.bf16.mxu0 0
    %293 = vmatpush2.bf16.msra.mxu0 0
    %294 = vmatprep.subr.bf16.mxu0 0
    %295 = vmatpush2.bf16.msra.mxu0 0
    %296 = vmatprep.subr.bf16.mxu0 0
    %297 = vmatpush2.bf16.msra.mxu0 0
    %298 = vmatprep.subr.bf16.mxu0 0
    %299 = vmatpush2.bf16.msra.mxu0 0
    %300 = vmatprep.subr.bf16.mxu0 0
    %301 = vmatpush2.bf16.msra.mxu0 0
    %302 = vmatprep.mubr.bf16.mxu0 0
    %303 = vmatmul.mubr.bf16.gmra.mxu0 %v198
    %v304 = vpop.f32.mrf.mxu0
    %v305 = vadd.f32 %v220, %v304
    %v306 = vpop.f32.mrf.mxu0
    %v307 = vpop.f32.mrf.mxu0
    %v308 = vpop.f32.mrf.mxu0
    %309 = vdwg.mxu0
    %v310 = vmul.f32 %v305, 0.5
    %v311 = vmul.f32 %v305, 0.70710677
    %v312 = verf.f32.pop %v311
    %v313 = vadd.f32 %v312, 1.0
    %v314 = vmul.f32 %v310, %v313
    %v315 = vpack.c.bf16 %v314, %v314
    %v316 = vld [vmem:[#allocation8] sm:$0xf]
    %v317 = vld [vmem:[#allocation8 + $0x4] sm:$0xf]
    %v318 = vld [vmem:[#allocation8 + $0x8] sm:$0xf]
    %v319 = vld [vmem:[#allocation8 + $0xc] sm:$0xf]
    %v320 = vld [vmem:[#allocation8 + $0x10] sm:$0xf]
    %v321 = vld [vmem:[#allocation8 + $0x14] sm:$0xf]
    %v322 = vld [vmem:[#allocation8 + $0x18] sm:$0xf]
    %v323 = vld [vmem:[#allocation8 + $0x1c] sm:$0xf]
    %v324 = vld [vmem:[#allocation8 + $0x20] sm:$0xf]
    %v325 = vld [vmem:[#allocation8 + $0x24] sm:$0xf]
    %v326 = vld [vmem:[#allocation8 + $0x28] sm:$0xf]
    %v327 = vld [vmem:[#allocation8 + $0x2c] sm:$0xf]
    %v328 = vld [vmem:[#allocation8 + $0x30] sm:$0xf]
    %v329 = vld [vmem:[#allocation8 + $0x34] sm:$0xf]
    %v330 = vld [vmem:[#allocation8 + $0x38] sm:$0xf]
    %v331 = vld [vmem:[#allocation8 + $0x3c] sm:$0xf]
    %v332 = vld [vmem:[%s6] sm:$0x1]
    %v334 = vlaneseq
    %v335 = vshrl.u32 %v334, 7
    %v336 = vsub.s32 0, %v335
    %v337 = vrot.slane %v332, %v336
    %v355 = vunpack.c.l.b16 %v316
    %v356 = vunpack.c.l.b16 %v317
    %v357 = vunpack.c.l.b16 %v318
    %v358 = vunpack.c.l.b16 %v319
    %v359 = vunpack.c.l.b16 %v320
    %v360 = vunpack.c.l.b16 %v321
    %v361 = vunpack.c.l.b16 %v322
    %v362 = vunpack.c.l.b16 %v323
    %v363 = vunpack.c.l.b16 %v324
    %v364 = vunpack.c.l.b16 %v325
    %v365 = vunpack.c.l.b16 %v326
    %v366 = vunpack.c.l.b16 %v327
    %v367 = vunpack.c.l.b16 %v328
    %v368 = vunpack.c.l.b16 %v329
    %v369 = vunpack.c.l.b16 %v330
    %v370 = vunpack.c.l.b16 %v331
    %v371 = vpack.c.b16 %v356, %v355
    %v372 = vpack.c.b16 %v358, %v357
    %v373 = vpack.c.b16 %v360, %v359
    %v374 = vpack.c.b16 %v362, %v361
    %v375 = vpack.c.b16 %v364, %v363
    %v376 = vpack.c.b16 %v366, %v365
    %v377 = vpack.c.b16 %v368, %v367
    %v378 = vpack.c.b16 %v370, %v369
    %387 = vmatprep.subr.bf16.mxu0 0
    %388 = vmatpush1.bf16.msra.mxu0 %v378
    %389 = vmatprep.subr.bf16.mxu0 0
    %390 = vmatpush1.bf16.msra.mxu0 %v377
    %391 = vmatprep.subr.bf16.mxu0 0
    %392 = vmatpush1.bf16.msra.mxu0 %v376
    %393 = vmatprep.subr.bf16.mxu0 0
    %394 = vmatpush1.bf16.msra.mxu0 %v375
    %395 = vmatprep.subr.bf16.mxu0 0
    %396 = vmatpush1.bf16.msra.mxu0 %v374
    %397 = vmatprep.subr.bf16.mxu0 0
    %398 = vmatpush1.bf16.msra.mxu0 %v373
    %399 = vmatprep.subr.bf16.mxu0 0
    %400 = vmatpush1.bf16.msra.mxu0 %v372
    %401 = vmatprep.subr.bf16.mxu0 0
    %402 = vmatpush1.bf16.msra.mxu0 %v371
    %403 = vmatprep.subr.bf16.mxu0 0
    %404 = vmatpush2.bf16.msra.mxu0 0
    %405 = vmatprep.subr.bf16.mxu0 0
    %406 = vmatpush2.bf16.msra.mxu0 0
    %407 = vmatprep.subr.bf16.mxu0 0
    %408 = vmatpush2.bf16.msra.mxu0 0
    %409 = vmatprep.subr.bf16.mxu0 0
    %410 = vmatpush2.bf16.msra.mxu0 0
    %411 = vmatprep.subr.bf16.mxu0 0
    %412 = vmatpush2.bf16.msra.mxu0 0
    %413 = vmatprep.subr.bf16.mxu0 0
    %414 = vmatpush2.bf16.msra.mxu0 0
    %415 = vmatprep.subr.bf16.mxu0 0
    %416 = vmatpush2.bf16.msra.mxu0 0
    %417 = vmatprep.subr.bf16.mxu0 0
    %418 = vmatpush2.bf16.msra.mxu0 0
    %419 = vmatprep.mubr.bf16.mxu0 0
    %420 = vmatmul.mubr.bf16.gmra.mxu0 %v315
    %v421 = vpop.f32.mrf.mxu0
    %v422 = vadd.f32 %v337, %v421
    %v423 = vpop.f32.mrf.mxu0
    %v424 = vpop.f32.mrf.mxu0
    %v425 = vpop.f32.mrf.mxu0
    %426 = vdwg.mxu0
    %427 = vst [vmem:[#allocation10] sm:$0xff] %v422
    // Predicated region
    $region46: #{tpu_custom_call.1} parent=1 // pred_check
      _
    $region47: #{tpu_custom_call.1} parent=1 // pred_check_branch
      %429 = sbr.rel (0) target = $region49
    $region48: #{tpu_custom_call.1} parent=1 // pred_region
      %s431 = ssub.s32 128, 128
      %432 = vsyncadd [#allocation4], %s431
      %s434 = sshll.u32 [#allocation10], 4
      %s435 = int_to_ptr.vmem [resolvable:$true] %s434
      %437 = dma.vmem_to_hbm [thread:$0]  %s435, 128, %s7, [#allocation4]
    $region49: #{tpu_custom_call.1} parent=1 // pred_fallthru
      _
    // Predicated region
    $region50: #{tpu_custom_call.1} parent=1 // pred_check
      _
    $region51: #{tpu_custom_call.1} parent=1 // pred_check_branch
      %439 = sbr.rel (0) target = $region53
    $region52: #{tpu_custom_call.1} parent=1 // pred_region
      %440 = dma.done [#allocation4], 128
    $region53: #{tpu_custom_call.1} parent=1 // pred_fallthru
      _
    %441 = vsyncpa [#allocation3], 1
    %442 = vsyncpa [#allocation6], 1
    %443 = vsyncpa [#allocation9], 1
    %444 = vsyncpa [#allocation4], 1

</llo_original>
